<compile_context>
chip_gen: v6e
topology: v6e:2x2x1
jax: 0.10.0
libtpu: 0.0.40
codegen_flags: <defaults>
</compile_context>

<pallas_src>
import functools

import jax
import jax.numpy as jnp
from jax.experimental import pallas as pl
from jax.experimental.pallas import tpu as pltpu

LANE = 128          # TPU lane width: every feature dim padded to a multiple of this.
ROW_ALIGN = 16      # bf16 sublane packing: batch tiles kept to multiples of 16 rows.
MAX_TILE = 256      # rows per grid step (fills MXU rows; one step for small batches).


def _round_up(n, m):
    return ((n + m - 1) // m) * m


def mlp_kernel(x_ref, w1_ref, b1_ref, w23_ref, b23_ref, w4_ref, b4_ref, o_ref):
    """relu(l1) -> relu(l2) -> relu(l3) -> l4; bf16 matmul inputs, f32 accumulate.

    w23_ref is the stacked (2, hid, hid) weights of layers 2 and 3; b23_ref is
    the stacked (2, 1, hid) biases. Bias-add and ReLU stay in f32 (VPU-friendly
    on v5e); activations are cast to bf16 only to feed the next MXU pass.
    """
    h = x_ref[...]  # bf16 (batch_tile, in_pad)

    h = jnp.dot(h, w1_ref[...], preferred_element_type=jnp.float32) + b1_ref[...]
    h = jnp.maximum(h, 0.0).astype(jnp.bfloat16)

    h = jnp.dot(h, w23_ref[0], preferred_element_type=jnp.float32) + b23_ref[0]
    h = jnp.maximum(h, 0.0).astype(jnp.bfloat16)

    h = jnp.dot(h, w23_ref[1], preferred_element_type=jnp.float32) + b23_ref[1]
    h = jnp.maximum(h, 0.0).astype(jnp.bfloat16)

    h = jnp.dot(h, w4_ref[...], preferred_element_type=jnp.float32) + b4_ref[...]
    o_ref[...] = h.astype(o_ref.dtype)


def prepare_params(params):
    """One-time padding + bf16 cast of the weights (hoisted out of the forward path).

    params: w{1..4} of shape (in, out) and b{1..4} of shape (1, out), all f32.
    Returns (prepared_dict, n_output).
    """
    n_input = params["w1"].shape[0]
    n_hidden = params["w1"].shape[1]
    n_output = params["w4"].shape[1]

    in_pad = _round_up(n_input, LANE)
    hid_pad = _round_up(n_hidden, LANE)
    out_pad = _round_up(n_output, LANE)

    # Zero padding keeps the math exact: 0 * w == 0 and padded bias columns are
    # 0, so relu(0) == 0 feeds the (zero) padded rows of the next weight.
    def pad_w(w, rows, cols):
        return jnp.zeros((rows, cols), jnp.bfloat16).at[
            :w.shape[0], :w.shape[1]].set(w.astype(jnp.bfloat16))

    def pad_b(b, cols):
        return jnp.zeros((1, cols), jnp.float32).at[:, :b.shape[1]].set(
            b.astype(jnp.float32))

    prepared = {
        "w1": pad_w(params["w1"], in_pad, hid_pad),
        "b1": pad_b(params["b1"], hid_pad),
        # Layers 2 and 3 share the (hid, hid) shape -> pack into one input each
        # for weights and biases (fewer DMA streams / BlockSpecs).
        "w23": jnp.stack([pad_w(params["w2"], hid_pad, hid_pad),
                          pad_w(params["w3"], hid_pad, hid_pad)]),
        "b23": jnp.stack([pad_b(params["b2"], hid_pad),
                          pad_b(params["b3"], hid_pad)]),
        "w4": pad_w(params["w4"], hid_pad, out_pad),
        "b4": pad_b(params["b4"], out_pad),
    }
    return prepared, n_output


@functools.partial(jax.jit, static_argnames=("n_output",))
def mlp_forward(x, prepared, *, n_output):
    """x: (B, n_input) f32. prepared: output of prepare_params(). Returns (B, n_output) f32."""
    B, n_input = x.shape
    in_pad, hid_pad = prepared["w1"].shape
    out_pad = prepared["w4"].shape[1]

    # Batch tiling: pad the batch UP to a legal tile instead of shrinking the
    # tile. One grid step for B <= MAX_TILE; MAX_TILE-row steps otherwise.
    B_pad = _round_up(B, ROW_ALIGN)
    batch_tile = min(MAX_TILE, B_pad)
    B_pad = _round_up(B_pad, batch_tile)
    num_steps = B_pad // batch_tile

    x_p = jnp.zeros((B_pad, in_pad), jnp.bfloat16).at[:B, :n_input].set(
        x.astype(jnp.bfloat16))

    def xmap(i):
        return (i, 0)

    def cmap2(i):           # resident 2-D weight/bias: same block every step
        return (0, 0)

    def cmap3(i):           # resident stacked weight/bias
        return (0, 0, 0)

    in_specs = [
        pl.BlockSpec((batch_tile, in_pad), xmap),
        pl.BlockSpec((in_pad, hid_pad), cmap2),
        pl.BlockSpec((1, hid_pad), cmap2),
        pl.BlockSpec((2, hid_pad, hid_pad), cmap3),
        pl.BlockSpec((2, 1, hid_pad), cmap3),
        pl.BlockSpec((hid_pad, out_pad), cmap2),
        pl.BlockSpec((1, out_pad), cmap2),
    ]
    out_specs = pl.BlockSpec((batch_tile, out_pad), xmap)

    # Cost estimate from the padded dims the kernel actually runs.
    flops = 2 * B_pad * (in_pad * hid_pad + 2 * hid_pad * hid_pad
                         + hid_pad * out_pad)
    param_bytes = sum(int(p.size) * p.dtype.itemsize for p in prepared.values())
    bytes_accessed = int(x_p.size) * 2 + param_bytes + B_pad * out_pad * 4
    cost = pl.CostEstimate(flops=int(flops), transcendentals=0,
                           bytes_accessed=int(bytes_accessed))

    out_p = pl.pallas_call(
        mlp_kernel,
        out_shape=jax.ShapeDtypeStruct((B_pad, out_pad), jnp.float32),
        grid_spec=pltpu.PrefetchScalarGridSpec(
            num_scalar_prefetch=0,
            grid=(num_steps,),
            in_specs=in_specs,
            out_specs=out_specs,
        ),
        compiler_params=pltpu.CompilerParams(
            dimension_semantics=("parallel",),  # batch steps -> megacore/dual-TC
        ),
        cost_estimate=cost,
    )(x_p, prepared["w1"], prepared["b1"], prepared["w23"], prepared["b23"],
      prepared["w4"], prepared["b4"])

    return out_p[:B, :n_output]


def init_params(key, n_input, n_hidden, n_output):
    """Deterministic init mimicking PyTorch nn.Linear default (U(+/- 1/sqrt(fan_in)))."""
    dims = [(n_input, n_hidden), (n_hidden, n_hidden),
            (n_hidden, n_hidden), (n_hidden, n_output)]
    params = {}
    for idx, (fan_in, fan_out) in enumerate(dims, start=1):
        key, kw, kb = jax.random.split(key, 3)
        bound = 1.0 / jnp.sqrt(fan_in)
        params[f"w{idx}"] = jax.random.uniform(
            kw, (fan_in, fan_out), jnp.float32, -bound, bound)
        params[f"b{idx}"] = jax.random.uniform(
            kb, (1, fan_out), jnp.float32, -bound, bound)
    return params


def reference_forward(x, params):
    h = jnp.maximum(x @ params["w1"] + params["b1"], 0.0)
    h = jnp.maximum(h @ params["w2"] + params["b2"], 0.0)
    h = jnp.maximum(h @ params["w3"] + params["b3"], 0.0)
    return h @ params["w4"] + params["b4"]


def reference_forward_bf16(x, params):
    """Reference with the same bf16-input / f32-accumulate casting as the kernel."""
    def lin(h, w, b):
        return jnp.dot(h.astype(jnp.bfloat16), w.astype(jnp.bfloat16),
                       preferred_element_type=jnp.float32) + b
    h = jnp.maximum(lin(x, params["w1"], params["b1"]), 0.0)
    h = jnp.maximum(lin(h, params["w2"], params["b2"]), 0.0)
    h = jnp.maximum(lin(h, params["w3"], params["b3"]), 0.0)
    return lin(h, params["w4"], params["b4"])


if __name__ == "__main__":
    n_input, n_hidden, n_output = 16, 32, 8
    batch = 256   # fits in one 256-row grid step

    key = jax.random.PRNGKey(0)
    key, kx = jax.random.split(key)
    x = jax.random.normal(kx, (batch, n_input), jnp.float32)
    params = init_params(key, n_input, n_hidden, n_output)

    # One-time weight padding/cast (hoisted out of the per-call path).
    prepared, n_out = prepare_params(params)
    prepared = jax.tree_util.tree_map(jax.block_until_ready, prepared)

    out = mlp_forward(x, prepared, n_output=n_out)
    out = jax.block_until_ready(out)
    assert out.shape == (batch, n_output)

    ref_bf16 = reference_forward_bf16(x, params)   # same casting -> tight match
    ref_f32 = reference_forward(x, params)         # full f32 -> loose match
    assert jnp.allclose(out, ref_bf16, atol=1e-2, rtol=1e-2)
    assert jnp.allclose(out, ref_f32, atol=5e-2, rtol=5e-2)

    print("KERNEL_OK")
</pallas_src>

<mosaic_0001>
module attributes {stable_mosaic.version = 11 : i64} {
  func.func @mlp_kernel(%arg0: i32, %arg1: memref<256x128xbf16, #tpu.memory_space<vmem>>, %arg2: memref<128x128xbf16, #tpu.memory_space<vmem>>, %arg3: memref<1x128xf32, #tpu.memory_space<vmem>>, %arg4: memref<2x128x128xbf16, #tpu.memory_space<vmem>>, %arg5: memref<2x1x128xf32, #tpu.memory_space<vmem>>, %arg6: memref<128x128xbf16, #tpu.memory_space<vmem>>, %arg7: memref<1x128xf32, #tpu.memory_space<vmem>>, %arg8: memref<256x128xf32, #tpu.memory_space<vmem>>) attributes {dimension_semantics = [#tpu.dimension_semantics<parallel>], iteration_bounds = array<i64: 1>, scalar_prefetch = 0 : i64, scratch_operands = 0 : i64, tpu.core_type = #tpu.core_type<tc>, window_params = [{transform_indices = @transform_0, window_bounds = array<i64: 256, 128>}, {pipeline_mode = #tpu.pipeline_mode<synchronous>, transform_indices = @transform_1, window_bounds = array<i64: 128, 128>}, {pipeline_mode = #tpu.pipeline_mode<synchronous>, transform_indices = @transform_2, window_bounds = array<i64: 1, 128>}, {pipeline_mode = #tpu.pipeline_mode<synchronous>, transform_indices = @transform_3, window_bounds = array<i64: 2, 128, 128>}, {pipeline_mode = #tpu.pipeline_mode<synchronous>, transform_indices = @transform_4, window_bounds = array<i64: 2, 1, 128>}, {pipeline_mode = #tpu.pipeline_mode<synchronous>, transform_indices = @transform_5, window_bounds = array<i64: 128, 128>}, {pipeline_mode = #tpu.pipeline_mode<synchronous>, transform_indices = @transform_6, window_bounds = array<i64: 1, 128>}, {transform_indices = @transform_7, window_bounds = array<i64: 256, 128>}]} {
    %c0 = arith.constant 0 : index
    %c0_0 = arith.constant 0 : index
    %0 = vector.load %arg1[%c0, %c0_0] : memref<256x128xbf16, #tpu.memory_space<vmem>>, vector<256x128xbf16>
    %c0_1 = arith.constant 0 : index
    %c0_2 = arith.constant 0 : index
    %1 = vector.load %arg2[%c0_1, %c0_2] : memref<128x128xbf16, #tpu.memory_space<vmem>>, vector<128x128xbf16>
    %cst = arith.constant dense<0.000000e+00> : vector<256x128xf32>
    %2 = tpu.matmul %0, %1, %cst {dimension_numbers = #tpu.dot_dimension_numbers<[1], [0], [0], [1], [0, 0, 1, 1], [], []>} : vector<256x128xbf16>, vector<128x128xbf16>, vector<256x128xf32> -> vector<256x128xf32>
    %c0_3 = arith.constant 0 : index
    %c0_4 = arith.constant 0 : index
    %3 = vector.load %arg3[%c0_3, %c0_4] : memref<1x128xf32, #tpu.memory_space<vmem>>, vector<1x128xf32>
    %4 = vector.broadcast %3 : vector<1x128xf32> to vector<256x128xf32>
    %5 = arith.addf %2, %4 : vector<256x128xf32>
    %cst_5 = arith.constant 0.000000e+00 : f32
    %6 = vector.broadcast %cst_5 : f32 to vector<256x128xf32>
    %7 = arith.maximumf %5, %6 : vector<256x128xf32>
    %8 = arith.truncf %7 : vector<256x128xf32> to vector<256x128xbf16>
    %c0_6 = arith.constant 0 : index
    %c0_7 = arith.constant 0 : index
    %c0_8 = arith.constant 0 : index
    %9 = vector.load %arg4[%c0_6, %c0_7, %c0_8] : memref<2x128x128xbf16, #tpu.memory_space<vmem>>, vector<1x128x128xbf16>
    %10 = vector.shape_cast %9 : vector<1x128x128xbf16> to vector<128x128xbf16>
    %cst_9 = arith.constant dense<0.000000e+00> : vector<256x128xf32>
    %11 = tpu.matmul %8, %10, %cst_9 {dimension_numbers = #tpu.dot_dimension_numbers<[1], [0], [0], [1], [0, 0, 1, 1], [], []>} : vector<256x128xbf16>, vector<128x128xbf16>, vector<256x128xf32> -> vector<256x128xf32>
    %c0_10 = arith.constant 0 : index
    %c0_11 = arith.constant 0 : index
    %c0_12 = arith.constant 0 : index
    %12 = vector.load %arg5[%c0_10, %c0_11, %c0_12] : memref<2x1x128xf32, #tpu.memory_space<vmem>>, vector<1x1x128xf32>
    %13 = vector.shape_cast %12 : vector<1x1x128xf32> to vector<1x128xf32>
    %14 = vector.broadcast %13 : vector<1x128xf32> to vector<256x128xf32>
    %15 = arith.addf %11, %14 : vector<256x128xf32>
    %cst_13 = arith.constant 0.000000e+00 : f32
    %16 = vector.broadcast %cst_13 : f32 to vector<256x128xf32>
    %17 = arith.maximumf %15, %16 : vector<256x128xf32>
    %18 = arith.truncf %17 : vector<256x128xf32> to vector<256x128xbf16>
    %c1 = arith.constant 1 : index
    %c0_14 = arith.constant 0 : index
    %c0_15 = arith.constant 0 : index
    %19 = vector.load %arg4[%c1, %c0_14, %c0_15] : memref<2x128x128xbf16, #tpu.memory_space<vmem>>, vector<1x128x128xbf16>
    %20 = vector.shape_cast %19 : vector<1x128x128xbf16> to vector<128x128xbf16>
    %cst_16 = arith.constant dense<0.000000e+00> : vector<256x128xf32>
    %21 = tpu.matmul %18, %20, %cst_16 {dimension_numbers = #tpu.dot_dimension_numbers<[1], [0], [0], [1], [0, 0, 1, 1], [], []>} : vector<256x128xbf16>, vector<128x128xbf16>, vector<256x128xf32> -> vector<256x128xf32>
    %c1_17 = arith.constant 1 : index
    %c0_18 = arith.constant 0 : index
    %c0_19 = arith.constant 0 : index
    %22 = vector.load %arg5[%c1_17, %c0_18, %c0_19] : memref<2x1x128xf32, #tpu.memory_space<vmem>>, vector<1x1x128xf32>
    %23 = vector.shape_cast %22 : vector<1x1x128xf32> to vector<1x128xf32>
    %24 = vector.broadcast %23 : vector<1x128xf32> to vector<256x128xf32>
    %25 = arith.addf %21, %24 : vector<256x128xf32>
    %cst_20 = arith.constant 0.000000e+00 : f32
    %26 = vector.broadcast %cst_20 : f32 to vector<256x128xf32>
    %27 = arith.maximumf %25, %26 : vector<256x128xf32>
    %28 = arith.truncf %27 : vector<256x128xf32> to vector<256x128xbf16>
    %c0_21 = arith.constant 0 : index
    %c0_22 = arith.constant 0 : index
    %29 = vector.load %arg6[%c0_21, %c0_22] : memref<128x128xbf16, #tpu.memory_space<vmem>>, vector<128x128xbf16>
    %cst_23 = arith.constant dense<0.000000e+00> : vector<256x128xf32>
    %30 = tpu.matmul %28, %29, %cst_23 {dimension_numbers = #tpu.dot_dimension_numbers<[1], [0], [0], [1], [0, 0, 1, 1], [], []>} : vector<256x128xbf16>, vector<128x128xbf16>, vector<256x128xf32> -> vector<256x128xf32>
    %c0_24 = arith.constant 0 : index
    %c0_25 = arith.constant 0 : index
    %31 = vector.load %arg7[%c0_24, %c0_25] : memref<1x128xf32, #tpu.memory_space<vmem>>, vector<1x128xf32>
    %32 = vector.broadcast %31 : vector<1x128xf32> to vector<256x128xf32>
    %33 = arith.addf %30, %32 : vector<256x128xf32>
    %c0_26 = arith.constant 0 : index
    %c0_27 = arith.constant 0 : index
    %34 = vector.load %arg8[%c0_26, %c0_27] : memref<256x128xf32, #tpu.memory_space<vmem>>, vector<256x128xf32>
    tpu.vector_store %arg8[%c0_26, %c0_27], %33 {strides = array<i32>} : memref<256x128xf32, #tpu.memory_space<vmem>>, vector<256x128xf32>,
    return
  }
  func.func @transform_0(%arg0: i32) -> (i32, i32) {
    %c0_i32 = arith.constant 0 : i32
    %c0_i32_0 = arith.constant 0 : i32
    return %arg0, %c0_i32 : i32, i32
  }
  func.func @transform_1(%arg0: i32) -> (i32, i32) {
    %c0_i32 = arith.constant 0 : i32
    %c0_i32_0 = arith.constant 0 : i32
    %c0_i32_1 = arith.constant 0 : i32
    return %c0_i32, %c0_i32_0 : i32, i32
  }
  func.func @transform_2(%arg0: i32) -> (i32, i32) {
    %c0_i32 = arith.constant 0 : i32
    %c0_i32_0 = arith.constant 0 : i32
    %c0_i32_1 = arith.constant 0 : i32
    return %c0_i32, %c0_i32_0 : i32, i32
  }
  func.func @transform_3(%arg0: i32) -> (i32, i32, i32) {
    %c0_i32 = arith.constant 0 : i32
    %c0_i32_0 = arith.constant 0 : i32
    %c0_i32_1 = arith.constant 0 : i32
    %c0_i32_2 = arith.constant 0 : i32
    return %c0_i32, %c0_i32_0, %c0_i32_1 : i32, i32, i32
  }
  func.func @transform_4(%arg0: i32) -> (i32, i32, i32) {
    %c0_i32 = arith.constant 0 : i32
    %c0_i32_0 = arith.constant 0 : i32
    %c0_i32_1 = arith.constant 0 : i32
    %c0_i32_2 = arith.constant 0 : i32
    return %c0_i32, %c0_i32_0, %c0_i32_1 : i32, i32, i32
  }
  func.func @transform_5(%arg0: i32) -> (i32, i32) {
    %c0_i32 = arith.constant 0 : i32
    %c0_i32_0 = arith.constant 0 : i32
    %c0_i32_1 = arith.constant 0 : i32
    return %c0_i32, %c0_i32_0 : i32, i32
  }
  func.func @transform_6(%arg0: i32) -> (i32, i32) {
    %c0_i32 = arith.constant 0 : i32
    %c0_i32_0 = arith.constant 0 : i32
    %c0_i32_1 = arith.constant 0 : i32
    return %c0_i32, %c0_i32_0 : i32, i32
  }
  func.func @transform_7(%arg0: i32) -> (i32, i32) {
    %c0_i32 = arith.constant 0 : i32
    %c0_i32_0 = arith.constant 0 : i32
    return %arg0, %c0_i32 : i32, i32
  }
}

</mosaic_0001>

<llo_original>
// kernel: mlp_forward.1
$region0: #{mlp_forward.1}
  #allocation0 [shape = 'u32[]', space=smem, size = 0x4, offset = 0x4, fixed_abs, tag = 'smem constant byte address 0x4 - core index']
  #allocation1 [shape = 'u32[144,128]{1,0:T(1,128)}', space=vmem, size = 0x12000, scoped, tag = 'internal scratch']
  %s0 = inlined_call_operand.vmem [shape: bf16[256,128], index: 0, kind: input, shape index: {}]
  %s1 = inlined_call_operand.vmem [shape: bf16[128,128], index: 1, kind: input, shape index: {}]
  %s2 = inlined_call_operand.vmem [shape: f32[1,128], index: 2, kind: input, shape index: {}]
  %s3 = inlined_call_operand.vmem [shape: bf16[2,128,128], index: 3, kind: input, shape index: {}]
  %s4 = inlined_call_operand.vmem [shape: f32[2,1,128], index: 4, kind: input, shape index: {}]
  %s5 = inlined_call_operand.vmem [shape: bf16[128,128], index: 5, kind: input, shape index: {}]
  %s6 = inlined_call_operand.vmem [shape: f32[1,128], index: 6, kind: input, shape index: {}]
  %s7 = inlined_call_operand.vmem [shape: f32[256,128], index: 7, kind: output, shape index: {}]
  %s8 = sld [smem:[#allocation0]]
  $region38: #{mlp_forward.1} parent=0
    _
  %s10 = ssub.s32 1, %s8
  %s11 = scalar_select 0, %s10, %s8
  // Predicated region
  $region2: #{mlp_forward.1} parent=0 // pred_check
    _
  $region3: #{mlp_forward.1} parent=0 // pred_check_branch
    %13 = sbr.rel (0) target = $region5
  $region4: #{mlp_forward.1} parent=0 // pred_region
    _
  $region5: #{mlp_forward.1} parent=0 // pred_fallthru
    _
  // Predicated region
  $region6: #{mlp_forward.1} parent=0 // pred_check
    _
  $region7: #{mlp_forward.1} parent=0 // pred_check_branch
    %15 = sbr.rel (0) target = $region9
  $region8: #{mlp_forward.1} parent=0 // pred_region
    _
  $region9: #{mlp_forward.1} parent=0 // pred_fallthru
    _
  // Predicated region
  $region10: #{mlp_forward.1} parent=0 // pred_check
    _
  $region11: #{mlp_forward.1} parent=0 // pred_check_branch
    %17 = sbr.rel (0) target = $region13
  $region12: #{mlp_forward.1} parent=0 // pred_region
    _
  $region13: #{mlp_forward.1} parent=0 // pred_fallthru
    _
  // Predicated region
  $region14: #{mlp_forward.1} parent=0 // pred_check
    _
  $region15: #{mlp_forward.1} parent=0 // pred_check_branch
    %19 = sbr.rel (0) target = $region17
  $region16: #{mlp_forward.1} parent=0 // pred_region
    _
  $region17: #{mlp_forward.1} parent=0 // pred_fallthru
    _
  // Predicated region
  $region18: #{mlp_forward.1} parent=0 // pred_check
    _
  $region19: #{mlp_forward.1} parent=0 // pred_check_branch
    %21 = sbr.rel (0) target = $region21
  $region20: #{mlp_forward.1} parent=0 // pred_region
    _
  $region21: #{mlp_forward.1} parent=0 // pred_fallthru
    _
  // Predicated region
  $region22: #{mlp_forward.1} parent=0 // pred_check
    _
  $region23: #{mlp_forward.1} parent=0 // pred_check_branch
    %23 = sbr.rel (0) target = $region25
  $region24: #{mlp_forward.1} parent=0 // pred_region
    _
  $region25: #{mlp_forward.1} parent=0 // pred_fallthru
    _
  // Predicated region
  $region26: #{mlp_forward.1} parent=0 // pred_check
    _
  $region27: #{mlp_forward.1} parent=0 // pred_check_branch
    %25 = sbr.rel (0) target = $region29
  $region28: #{mlp_forward.1} parent=0 // pred_region
    _
  $region29: #{mlp_forward.1} parent=0 // pred_fallthru
    _
  %v27 = vld [vmem:[%s0] sm:$0xf]
  %v28 = vld [vmem:[%s0 + $0x4] sm:$0xf]
  %v29 = vld [vmem:[%s0 + $0x8] sm:$0xf]
  %v30 = vld [vmem:[%s0 + $0xc] sm:$0xf]
  %v31 = vld [vmem:[%s0 + $0x10] sm:$0xf]
  %v32 = vld [vmem:[%s0 + $0x14] sm:$0xf]
  %v33 = vld [vmem:[%s0 + $0x18] sm:$0xf]
  %v34 = vld [vmem:[%s0 + $0x1c] sm:$0xf]
  %v35 = vld [vmem:[%s0 + $0x20] sm:$0xf]
  %v36 = vld [vmem:[%s0 + $0x24] sm:$0xf]
  %v37 = vld [vmem:[%s0 + $0x28] sm:$0xf]
  %v38 = vld [vmem:[%s0 + $0x2c] sm:$0xf]
  %v39 = vld [vmem:[%s0 + $0x30] sm:$0xf]
  %v40 = vld [vmem:[%s0 + $0x34] sm:$0xf]
  %v41 = vld [vmem:[%s0 + $0x38] sm:$0xf]
  %v42 = vld [vmem:[%s0 + $0x3c] sm:$0xf]
  %v43 = vld [vmem:[%s0 + $0x40] sm:$0xf]
  %v44 = vld [vmem:[%s0 + $0x44] sm:$0xf]
  %v45 = vld [vmem:[%s0 + $0x48] sm:$0xf]
  %v46 = vld [vmem:[%s0 + $0x4c] sm:$0xf]
  %v47 = vld [vmem:[%s0 + $0x50] sm:$0xf]
  %v48 = vld [vmem:[%s0 + $0x54] sm:$0xf]
  %v49 = vld [vmem:[%s0 + $0x58] sm:$0xf]
  %v50 = vld [vmem:[%s0 + $0x5c] sm:$0xf]
  %v51 = vld [vmem:[%s0 + $0x60] sm:$0xf]
  %v52 = vld [vmem:[%s0 + $0x64] sm:$0xf]
  %v53 = vld [vmem:[%s0 + $0x68] sm:$0xf]
  %v54 = vld [vmem:[%s0 + $0x6c] sm:$0xf]
  %v55 = vld [vmem:[%s0 + $0x70] sm:$0xf]
  %v56 = vld [vmem:[%s0 + $0x74] sm:$0xf]
  %v57 = vld [vmem:[%s0 + $0x78] sm:$0xf]
  %v58 = vld [vmem:[%s0 + $0x7c] sm:$0xf]
  %v59 = vld [vmem:[%s1] sm:$0xf]
  %v60 = vld [vmem:[%s1 + $0x4] sm:$0xf]
  %v61 = vld [vmem:[%s1 + $0x8] sm:$0xf]
  %v62 = vld [vmem:[%s1 + $0xc] sm:$0xf]
  %v63 = vld [vmem:[%s1 + $0x10] sm:$0xf]
  %v64 = vld [vmem:[%s1 + $0x14] sm:$0xf]
  %v65 = vld [vmem:[%s1 + $0x18] sm:$0xf]
  %v66 = vld [vmem:[%s1 + $0x1c] sm:$0xf]
  %v67 = vld [vmem:[%s1 + $0x20] sm:$0xf]
  %v68 = vld [vmem:[%s1 + $0x24] sm:$0xf]
  %v69 = vld [vmem:[%s1 + $0x28] sm:$0xf]
  %v70 = vld [vmem:[%s1 + $0x2c] sm:$0xf]
  %v71 = vld [vmem:[%s1 + $0x30] sm:$0xf]
  %v72 = vld [vmem:[%s1 + $0x34] sm:$0xf]
  %v73 = vld [vmem:[%s1 + $0x38] sm:$0xf]
  %v74 = vld [vmem:[%s1 + $0x3c] sm:$0xf]
  %v75 = vld [vmem:[%s2] sm:$0x1]
  %v77 = vlaneseq
  %v78 = vshrl.u32 %v77, 7
  %v79 = vsub.s32 0, %v78
  %v80 = vrot.slane %v75, %v79
  %v114 = vunpack.c.l.b16 %v27
  %v115 = vunpack.c.l.b16 %v28
  %v116 = vunpack.c.l.b16 %v29
  %v117 = vunpack.c.l.b16 %v30
  %v118 = vunpack.c.l.b16 %v31
  %v119 = vunpack.c.l.b16 %v32
  %v120 = vunpack.c.l.b16 %v33
  %v121 = vunpack.c.l.b16 %v34
  %v122 = vunpack.c.l.b16 %v35
  %v123 = vunpack.c.l.b16 %v36
  %v124 = vunpack.c.l.b16 %v37
  %v125 = vunpack.c.l.b16 %v38
  %v126 = vunpack.c.l.b16 %v39
  %v127 = vunpack.c.l.b16 %v40
  %v128 = vunpack.c.l.b16 %v41
  %v129 = vunpack.c.l.b16 %v42
  %v130 = vunpack.c.l.b16 %v43
  %v131 = vunpack.c.l.b16 %v44
  %v132 = vunpack.c.l.b16 %v45
  %v133 = vunpack.c.l.b16 %v46
  %v134 = vunpack.c.l.b16 %v47
  %v135 = vunpack.c.l.b16 %v48
  %v136 = vunpack.c.l.b16 %v49
  %v137 = vunpack.c.l.b16 %v50
  %v138 = vunpack.c.l.b16 %v51
  %v139 = vunpack.c.l.b16 %v52
  %v140 = vunpack.c.l.b16 %v53
  %v141 = vunpack.c.l.b16 %v54
  %v142 = vunpack.c.l.b16 %v55
  %v143 = vunpack.c.l.b16 %v56
  %v144 = vunpack.c.l.b16 %v57
  %v145 = vunpack.c.l.b16 %v58
  %v146 = vpack.c.b16 %v115, %v114
  %v147 = vpack.c.b16 %v117, %v116
  %v148 = vpack.c.b16 %v119, %v118
  %v149 = vpack.c.b16 %v121, %v120
  %v150 = vpack.c.b16 %v123, %v122
  %v151 = vpack.c.b16 %v125, %v124
  %v152 = vpack.c.b16 %v127, %v126
  %v153 = vpack.c.b16 %v129, %v128
  %v154 = vpack.c.b16 %v131, %v130
  %v155 = vpack.c.b16 %v133, %v132
  %v156 = vpack.c.b16 %v135, %v134
  %v157 = vpack.c.b16 %v137, %v136
  %v158 = vpack.c.b16 %v139, %v138
  %v159 = vpack.c.b16 %v141, %v140
  %v160 = vpack.c.b16 %v143, %v142
  %v161 = vpack.c.b16 %v145, %v144
  %v194 = vunpack.c.l.b16 %v59
  %v195 = vunpack.c.l.b16 %v60
  %v196 = vunpack.c.l.b16 %v61
  %v197 = vunpack.c.l.b16 %v62
  %v198 = vunpack.c.l.b16 %v63
  %v199 = vunpack.c.l.b16 %v64
  %v200 = vunpack.c.l.b16 %v65
  %v201 = vunpack.c.l.b16 %v66
  %v202 = vunpack.c.l.b16 %v67
  %v203 = vunpack.c.l.b16 %v68
  %v204 = vunpack.c.l.b16 %v69
  %v205 = vunpack.c.l.b16 %v70
  %v206 = vunpack.c.l.b16 %v71
  %v207 = vunpack.c.l.b16 %v72
  %v208 = vunpack.c.l.b16 %v73
  %v209 = vunpack.c.l.b16 %v74
  %v210 = vpack.c.b16 %v195, %v194
  %v211 = vpack.c.b16 %v197, %v196
  %v212 = vpack.c.b16 %v199, %v198
  %v213 = vpack.c.b16 %v201, %v200
  %v214 = vpack.c.b16 %v203, %v202
  %v215 = vpack.c.b16 %v205, %v204
  %v216 = vpack.c.b16 %v207, %v206
  %v217 = vpack.c.b16 %v209, %v208
  %226 = vmatprep.subr.bf16.mxu0 0
  %227 = vmatpush1.bf16.msra.mxu0 %v217
  %228 = vmatprep.subr.bf16.mxu0 0
  %229 = vmatpush1.bf16.msra.mxu0 %v216
  %230 = vmatprep.subr.bf16.mxu0 0
  %231 = vmatpush1.bf16.msra.mxu0 %v215
  %232 = vmatprep.subr.bf16.mxu0 0
  %233 = vmatpush1.bf16.msra.mxu0 %v214
  %234 = vmatprep.subr.bf16.mxu0 0
  %235 = vmatpush1.bf16.msra.mxu0 %v213
  %236 = vmatprep.subr.bf16.mxu0 0
  %237 = vmatpush1.bf16.msra.mxu0 %v212
  %238 = vmatprep.subr.bf16.mxu0 0
  %239 = vmatpush1.bf16.msra.mxu0 %v211
  %240 = vmatprep.subr.bf16.mxu0 0
  %241 = vmatpush1.bf16.msra.mxu0 %v210
  %242 = vmatprep.subr.bf16.mxu0 0
  %243 = vmatpush2.bf16.msra.mxu0 0
  %244 = vmatprep.subr.bf16.mxu0 0
  %245 = vmatpush2.bf16.msra.mxu0 0
  %246 = vmatprep.subr.bf16.mxu0 0
  %247 = vmatpush2.bf16.msra.mxu0 0
  %248 = vmatprep.subr.bf16.mxu0 0
  %249 = vmatpush2.bf16.msra.mxu0 0
  %250 = vmatprep.subr.bf16.mxu0 0
  %251 = vmatpush2.bf16.msra.mxu0 0
  %252 = vmatprep.subr.bf16.mxu0 0
  %253 = vmatpush2.bf16.msra.mxu0 0
  %254 = vmatprep.subr.bf16.mxu0 0
  %255 = vmatpush2.bf16.msra.mxu0 0
  %256 = vmatprep.subr.bf16.mxu0 0
  %257 = vmatpush2.bf16.msra.mxu0 0
  %258 = vmatprep.mubr.bf16.mxu0 0
  %259 = vmatmul.mubr.bf16.gmra.mxu0 %v146
  %v260 = vpop.f32.mrf.mxu0
  %v261 = vadd.f32 %v80, %v260
  %v262 = vpop.f32.mrf.mxu0
  %v263 = vpop.f32.mrf.mxu0
  %v264 = vadd.f32 %v80, %v263
  %v265 = vpop.f32.mrf.mxu0
  %266 = vmatprep.mubr.bf16.mxu0 0
  %267 = vmatmul.mubr.bf16.gmra.mxu0 %v147
  %v268 = vpop.f32.mrf.mxu0
  %v269 = vadd.f32 %v80, %v268
  %v270 = vpop.f32.mrf.mxu0
  %v271 = vpop.f32.mrf.mxu0
  %v272 = vadd.f32 %v80, %v271
  %v273 = vpop.f32.mrf.mxu0
  %274 = vmatprep.mubr.bf16.mxu0 0
  %275 = vmatmul.mubr.bf16.gmra.mxu0 %v148
  %v276 = vpop.f32.mrf.mxu0
  %v277 = vadd.f32 %v80, %v276
  %v278 = vpop.f32.mrf.mxu0
  %v279 = vpop.f32.mrf.mxu0
  %v280 = vadd.f32 %v80, %v279
  %v281 = vpop.f32.mrf.mxu0
  %282 = vmatprep.mubr.bf16.mxu0 0
  %283 = vmatmul.mubr.bf16.gmra.mxu0 %v149
  %v284 = vpop.f32.mrf.mxu0
  %v285 = vadd.f32 %v80, %v284
  %v286 = vpop.f32.mrf.mxu0
  %v287 = vpop.f32.mrf.mxu0
  %v288 = vadd.f32 %v80, %v287
  %v289 = vpop.f32.mrf.mxu0
  %290 = vmatprep.mubr.bf16.mxu0 0
  %291 = vmatmul.mubr.bf16.gmra.mxu0 %v150
  %v292 = vpop.f32.mrf.mxu0
  %v293 = vadd.f32 %v80, %v292
  %v294 = vpop.f32.mrf.mxu0
  %v295 = vpop.f32.mrf.mxu0
  %v296 = vadd.f32 %v80, %v295
  %v297 = vpop.f32.mrf.mxu0
  %298 = vmatprep.mubr.bf16.mxu0 0
  %299 = vmatmul.mubr.bf16.gmra.mxu0 %v151
  %v300 = vpop.f32.mrf.mxu0
  %v301 = vadd.f32 %v80, %v300
  %v302 = vpop.f32.mrf.mxu0
  %v303 = vpop.f32.mrf.mxu0
  %v304 = vadd.f32 %v80, %v303
  %v305 = vpop.f32.mrf.mxu0
  %306 = vmatprep.mubr.bf16.mxu0 0
  %307 = vmatmul.mubr.bf16.gmra.mxu0 %v152
  %v308 = vpop.f32.mrf.mxu0
  %v309 = vadd.f32 %v80, %v308
  %v310 = vpop.f32.mrf.mxu0
  %v311 = vpop.f32.mrf.mxu0
  %v312 = vadd.f32 %v80, %v311
  %v313 = vpop.f32.mrf.mxu0
  %314 = vmatprep.mubr.bf16.mxu0 0
  %315 = vmatmul.mubr.bf16.gmra.mxu0 %v153
  %v316 = vpop.f32.mrf.mxu0
  %v317 = vadd.f32 %v80, %v316
  %v318 = vpop.f32.mrf.mxu0
  %v319 = vpop.f32.mrf.mxu0
  %v320 = vadd.f32 %v80, %v319
  %v321 = vpop.f32.mrf.mxu0
  %322 = vmatprep.mubr.bf16.mxu0 0
  %323 = vmatmul.mubr.bf16.gmra.mxu0 %v154
  %v324 = vpop.f32.mrf.mxu0
  %v325 = vadd.f32 %v80, %v324
  %v326 = vpop.f32.mrf.mxu0
  %v327 = vpop.f32.mrf.mxu0
  %v328 = vadd.f32 %v80, %v327
  %v329 = vpop.f32.mrf.mxu0
  %330 = vmatprep.mubr.bf16.mxu0 0
  %331 = vmatmul.mubr.bf16.gmra.mxu0 %v155
  %v332 = vpop.f32.mrf.mxu0
  %v333 = vadd.f32 %v80, %v332
  %v334 = vpop.f32.mrf.mxu0
  %v335 = vpop.f32.mrf.mxu0
  %v336 = vadd.f32 %v80, %v335
  %v337 = vpop.f32.mrf.mxu0
  %338 = vmatprep.mubr.bf16.mxu0 0
  %339 = vmatmul.mubr.bf16.gmra.mxu0 %v156
  %v340 = vpop.f32.mrf.mxu0
  %v341 = vadd.f32 %v80, %v340
  %v342 = vpop.f32.mrf.mxu0
  %v343 = vpop.f32.mrf.mxu0
  %v344 = vadd.f32 %v80, %v343
  %v345 = vpop.f32.mrf.mxu0
  %346 = vmatprep.mubr.bf16.mxu0 0
  %347 = vmatmul.mubr.bf16.gmra.mxu0 %v157
  %v348 = vpop.f32.mrf.mxu0
  %v349 = vadd.f32 %v80, %v348
  %v350 = vpop.f32.mrf.mxu0
  %v351 = vpop.f32.mrf.mxu0
  %v352 = vadd.f32 %v80, %v351
  %v353 = vpop.f32.mrf.mxu0
  %354 = vmatprep.mubr.bf16.mxu0 0
  %355 = vmatmul.mubr.bf16.gmra.mxu0 %v158
  %v356 = vpop.f32.mrf.mxu0
  %v357 = vadd.f32 %v80, %v356
  %v358 = vpop.f32.mrf.mxu0
  %v359 = vpop.f32.mrf.mxu0
  %v360 = vadd.f32 %v80, %v359
  %v361 = vpop.f32.mrf.mxu0
  %362 = vmatprep.mubr.bf16.mxu0 0
  %363 = vmatmul.mubr.bf16.gmra.mxu0 %v159
  %v364 = vpop.f32.mrf.mxu0
  %v365 = vadd.f32 %v80, %v364
  %v366 = vpop.f32.mrf.mxu0
  %v367 = vpop.f32.mrf.mxu0
  %v368 = vadd.f32 %v80, %v367
  %v369 = vpop.f32.mrf.mxu0
  %370 = vmatprep.mubr.bf16.mxu0 0
  %371 = vmatmul.mubr.bf16.gmra.mxu0 %v160
  %v372 = vpop.f32.mrf.mxu0
  %v373 = vadd.f32 %v80, %v372
  %v374 = vpop.f32.mrf.mxu0
  %v375 = vpop.f32.mrf.mxu0
  %v376 = vadd.f32 %v80, %v375
  %v377 = vpop.f32.mrf.mxu0
  %378 = vmatprep.mubr.bf16.mxu0 0
  %379 = vmatmul.mubr.bf16.gmra.mxu0 %v161
  %v380 = vpop.f32.mrf.mxu0
  %v381 = vadd.f32 %v80, %v380
  %v382 = vpop.f32.mrf.mxu0
  %v383 = vpop.f32.mrf.mxu0
  %v384 = vadd.f32 %v80, %v383
  %v385 = vpop.f32.mrf.mxu0
  %386 = vdwg.mxu0
  %v387 = vmax.f32 %v261, 0.0
  %v388 = vmax.f32 %v264, 0.0
  %v389 = vmax.f32 %v269, 0.0
  %v390 = vmax.f32 %v272, 0.0
  %v391 = vmax.f32 %v277, 0.0
  %v392 = vmax.f32 %v280, 0.0
  %v393 = vmax.f32 %v285, 0.0
  %v394 = vmax.f32 %v288, 0.0
  %v395 = vmax.f32 %v293, 0.0
  %v396 = vmax.f32 %v296, 0.0
  %v397 = vmax.f32 %v301, 0.0
  %v398 = vmax.f32 %v304, 0.0
  %v399 = vmax.f32 %v309, 0.0
  %v400 = vmax.f32 %v312, 0.0
  %v401 = vmax.f32 %v317, 0.0
  %v402 = vmax.f32 %v320, 0.0
  %v403 = vmax.f32 %v325, 0.0
  %v404 = vmax.f32 %v328, 0.0
  %v405 = vmax.f32 %v333, 0.0
  %v406 = vmax.f32 %v336, 0.0
  %v407 = vmax.f32 %v341, 0.0
  %v408 = vmax.f32 %v344, 0.0
  %v409 = vmax.f32 %v349, 0.0
  %v410 = vmax.f32 %v352, 0.0
  %v411 = vmax.f32 %v357, 0.0
  %v412 = vmax.f32 %v360, 0.0
  %v413 = vmax.f32 %v365, 0.0
  %v414 = vmax.f32 %v368, 0.0
  %v415 = vmax.f32 %v373, 0.0
  %v416 = vmax.f32 %v376, 0.0
  %v417 = vmax.f32 %v381, 0.0
  %v418 = vmax.f32 %v384, 0.0
  %v419 = vpack.c.bf16 %v388, %v387
  %v420 = vpack.c.bf16 %v390, %v389
  %v421 = vpack.c.bf16 %v392, %v391
  %v422 = vpack.c.bf16 %v394, %v393
  %v423 = vpack.c.bf16 %v396, %v395
  %v424 = vpack.c.bf16 %v398, %v397
  %v425 = vpack.c.bf16 %v400, %v399
  %v426 = vpack.c.bf16 %v402, %v401
  %v427 = vpack.c.bf16 %v404, %v403
  %v428 = vpack.c.bf16 %v406, %v405
  %v429 = vpack.c.bf16 %v408, %v407
  %v430 = vpack.c.bf16 %v410, %v409
  %v431 = vpack.c.bf16 %v412, %v411
  %v432 = vpack.c.bf16 %v414, %v413
  %v433 = vpack.c.bf16 %v416, %v415
  %v434 = vpack.c.bf16 %v418, %v417
  %v435 = vld [vmem:[%s3] sm:$0xf]
  %v436 = vld [vmem:[%s3 + $0x4] sm:$0xf]
  %v437 = vld [vmem:[%s3 + $0x8] sm:$0xf]
  %v438 = vld [vmem:[%s3 + $0xc] sm:$0xf]
  %v439 = vld [vmem:[%s3 + $0x10] sm:$0xf]
  %v440 = vld [vmem:[%s3 + $0x14] sm:$0xf]
  %v441 = vld [vmem:[%s3 + $0x18] sm:$0xf]
  %v442 = vld [vmem:[%s3 + $0x1c] sm:$0xf]
  %v443 = vld [vmem:[%s3 + $0x20] sm:$0xf]
  %v444 = vld [vmem:[%s3 + $0x24] sm:$0xf]
  %v445 = vld [vmem:[%s3 + $0x28] sm:$0xf]
  %v446 = vld [vmem:[%s3 + $0x2c] sm:$0xf]
  %v447 = vld [vmem:[%s3 + $0x30] sm:$0xf]
  %v448 = vld [vmem:[%s3 + $0x34] sm:$0xf]
  %v449 = vld [vmem:[%s3 + $0x38] sm:$0xf]
  %v450 = vld [vmem:[%s3 + $0x3c] sm:$0xf]
  %v451 = vld [vmem:[%s4] sm:$0x1]
  %v453 = vlaneseq
  %v454 = vshrl.u32 %v453, 7
  %v455 = vsub.s32 0, %v454
  %v456 = vrot.slane %v451, %v455
  %v474 = vunpack.c.l.b16 %v435
  %v475 = vunpack.c.l.b16 %v436
  %v476 = vunpack.c.l.b16 %v437
  %v477 = vunpack.c.l.b16 %v438
  %v478 = vunpack.c.l.b16 %v439
  %v479 = vunpack.c.l.b16 %v440
  %v480 = vunpack.c.l.b16 %v441
  %v481 = vunpack.c.l.b16 %v442
  %v482 = vunpack.c.l.b16 %v443
  %v483 = vunpack.c.l.b16 %v444
  %v484 = vunpack.c.l.b16 %v445
  %v485 = vunpack.c.l.b16 %v446
  %v486 = vunpack.c.l.b16 %v447
  %v487 = vunpack.c.l.b16 %v448
  %v488 = vunpack.c.l.b16 %v449
  %v489 = vunpack.c.l.b16 %v450
  %v490 = vpack.c.b16 %v475, %v474
  %v491 = vpack.c.b16 %v477, %v476
  %v492 = vpack.c.b16 %v479, %v478
  %v493 = vpack.c.b16 %v481, %v480
  %v494 = vpack.c.b16 %v483, %v482
  %v495 = vpack.c.b16 %v485, %v484
  %v496 = vpack.c.b16 %v487, %v486
  %v497 = vpack.c.b16 %v489, %v488
  %506 = vmatprep.subr.bf16.mxu0 0
  %507 = vmatpush1.bf16.msra.mxu0 %v497
  %508 = vmatprep.subr.bf16.mxu0 0
  %509 = vmatpush1.bf16.msra.mxu0 %v496
  %510 = vmatprep.subr.bf16.mxu0 0
  %511 = vmatpush1.bf16.msra.mxu0 %v495
  %512 = vmatprep.subr.bf16.mxu0 0
  %513 = vmatpush1.bf16.msra.mxu0 %v494
  %514 = vmatprep.subr.bf16.mxu0 0
  %515 = vmatpush1.bf16.msra.mxu0 %v493
  %516 = vmatprep.subr.bf16.mxu0 0
  %517 = vmatpush1.bf16.msra.mxu0 %v492
  %518 = vmatprep.subr.bf16.mxu0 0
  %519 = vmatpush1.bf16.msra.mxu0 %v491
  %520 = vmatprep.subr.bf16.mxu0 0
  %521 = vmatpush1.bf16.msra.mxu0 %v490
  %522 = vmatprep.subr.bf16.mxu0 0
  %523 = vmatpush2.bf16.msra.mxu0 0
  %524 = vmatprep.subr.bf16.mxu0 0
  %525 = vmatpush2.bf16.msra.mxu0 0
  %526 = vmatprep.subr.bf16.mxu0 0
  %527 = vmatpush2.bf16.msra.mxu0 0
  %528 = vmatprep.subr.bf16.mxu0 0
  %529 = vmatpush2.bf16.msra.mxu0 0
  %530 = vmatprep.subr.bf16.mxu0 0
  %531 = vmatpush2.bf16.msra.mxu0 0
  %532 = vmatprep.subr.bf16.mxu0 0
  %533 = vmatpush2.bf16.msra.mxu0 0
  %534 = vmatprep.subr.bf16.mxu0 0
  %535 = vmatpush2.bf16.msra.mxu0 0
  %536 = vmatprep.subr.bf16.mxu0 0
  %537 = vmatpush2.bf16.msra.mxu0 0
  %538 = vmatprep.mubr.bf16.mxu0 0
  %539 = vmatmul.mubr.bf16.gmra.mxu0 %v419
  %v540 = vpop.f32.mrf.mxu0
  %v541 = vadd.f32 %v456, %v540
  %v542 = vpop.f32.mrf.mxu0
  %v543 = vpop.f32.mrf.mxu0
  %v544 = vadd.f32 %v456, %v543
  %v545 = vpop.f32.mrf.mxu0
  %546 = vmatprep.mubr.bf16.mxu0 0
  %547 = vmatmul.mubr.bf16.gmra.mxu0 %v420
  %v548 = vpop.f32.mrf.mxu0
  %v549 = vadd.f32 %v456, %v548
  %v550 = vpop.f32.mrf.mxu0
  %v551 = vpop.f32.mrf.mxu0
  %v552 = vadd.f32 %v456, %v551
  %v553 = vpop.f32.mrf.mxu0
  %554 = vmatprep.mubr.bf16.mxu0 0
  %555 = vmatmul.mubr.bf16.gmra.mxu0 %v421
  %v556 = vpop.f32.mrf.mxu0
  %v557 = vadd.f32 %v456, %v556
  %v558 = vpop.f32.mrf.mxu0
  %v559 = vpop.f32.mrf.mxu0
  %v560 = vadd.f32 %v456, %v559
  %v561 = vpop.f32.mrf.mxu0
  %562 = vmatprep.mubr.bf16.mxu0 0
  %563 = vmatmul.mubr.bf16.gmra.mxu0 %v422
  %v564 = vpop.f32.mrf.mxu0
  %v565 = vadd.f32 %v456, %v564
  %v566 = vpop.f32.mrf.mxu0
  %v567 = vpop.f32.mrf.mxu0
  %v568 = vadd.f32 %v456, %v567
  %v569 = vpop.f32.mrf.mxu0
  %570 = vmatprep.mubr.bf16.mxu0 0
  %571 = vmatmul.mubr.bf16.gmra.mxu0 %v423
  %v572 = vpop.f32.mrf.mxu0
  %v573 = vadd.f32 %v456, %v572
  %v574 = vpop.f32.mrf.mxu0
  %v575 = vpop.f32.mrf.mxu0
  %v576 = vadd.f32 %v456, %v575
  %v577 = vpop.f32.mrf.mxu0
  %578 = vmatprep.mubr.bf16.mxu0 0
  %579 = vmatmul.mubr.bf16.gmra.mxu0 %v424
  %v580 = vpop.f32.mrf.mxu0
  %v581 = vadd.f32 %v456, %v580
  %v582 = vpop.f32.mrf.mxu0
  %v583 = vpop.f32.mrf.mxu0
  %v584 = vadd.f32 %v456, %v583
  %v585 = vpop.f32.mrf.mxu0
  %586 = vmatprep.mubr.bf16.mxu0 0
  %587 = vmatmul.mubr.bf16.gmra.mxu0 %v425
  %v588 = vpop.f32.mrf.mxu0
  %v589 = vadd.f32 %v456, %v588
  %v590 = vpop.f32.mrf.mxu0
  %v591 = vpop.f32.mrf.mxu0
  %v592 = vadd.f32 %v456, %v591
  %v593 = vpop.f32.mrf.mxu0
  %594 = vmatprep.mubr.bf16.mxu0 0
  %595 = vmatmul.mubr.bf16.gmra.mxu0 %v426
  %v596 = vpop.f32.mrf.mxu0
  %v597 = vadd.f32 %v456, %v596
  %v598 = vpop.f32.mrf.mxu0
  %v599 = vpop.f32.mrf.mxu0
  %v600 = vadd.f32 %v456, %v599
  %v601 = vpop.f32.mrf.mxu0
  %602 = vmatprep.mubr.bf16.mxu0 0
  %603 = vmatmul.mubr.bf16.gmra.mxu0 %v427
  %v604 = vpop.f32.mrf.mxu0
  %v605 = vadd.f32 %v456, %v604
  %v606 = vpop.f32.mrf.mxu0
  %v607 = vpop.f32.mrf.mxu0
  %v608 = vadd.f32 %v456, %v607
  %v609 = vpop.f32.mrf.mxu0
  %610 = vmatprep.mubr.bf16.mxu0 0
  %611 = vmatmul.mubr.bf16.gmra.mxu0 %v428
  %v612 = vpop.f32.mrf.mxu0
  %v613 = vadd.f32 %v456, %v612
  %v614 = vpop.f32.mrf.mxu0
  %v615 = vpop.f32.mrf.mxu0
  %v616 = vadd.f32 %v456, %v615
  %v617 = vpop.f32.mrf.mxu0
  %618 = vmatprep.mubr.bf16.mxu0 0
  %619 = vmatmul.mubr.bf16.gmra.mxu0 %v429
  %v620 = vpop.f32.mrf.mxu0
  %v621 = vadd.f32 %v456, %v620
  %v622 = vpop.f32.mrf.mxu0
  %v623 = vpop.f32.mrf.mxu0
  %v624 = vadd.f32 %v456, %v623
  %v625 = vpop.f32.mrf.mxu0
  %626 = vmatprep.mubr.bf16.mxu0 0
  %627 = vmatmul.mubr.bf16.gmra.mxu0 %v430
  %v628 = vpop.f32.mrf.mxu0
  %v629 = vadd.f32 %v456, %v628
  %v630 = vpop.f32.mrf.mxu0
  %v631 = vpop.f32.mrf.mxu0
  %v632 = vadd.f32 %v456, %v631
  %v633 = vpop.f32.mrf.mxu0
  %634 = vmatprep.mubr.bf16.mxu0 0
  %635 = vmatmul.mubr.bf16.gmra.mxu0 %v431
  %v636 = vpop.f32.mrf.mxu0
  %v637 = vadd.f32 %v456, %v636
  %v638 = vpop.f32.mrf.mxu0
  %v639 = vpop.f32.mrf.mxu0
  %v640 = vadd.f32 %v456, %v639
  %v641 = vpop.f32.mrf.mxu0
  %642 = vmatprep.mubr.bf16.mxu0 0
  %643 = vmatmul.mubr.bf16.gmra.mxu0 %v432
  %v644 = vpop.f32.mrf.mxu0
  %v645 = vadd.f32 %v456, %v644
  %v646 = vpop.f32.mrf.mxu0
  %v647 = vpop.f32.mrf.mxu0
  %v648 = vadd.f32 %v456, %v647
  %v649 = vpop.f32.mrf.mxu0
  %650 = vmatprep.mubr.bf16.mxu0 0
  %651 = vmatmul.mubr.bf16.gmra.mxu0 %v433
  %v652 = vpop.f32.mrf.mxu0
  %v653 = vadd.f32 %v456, %v652
  %v654 = vpop.f32.mrf.mxu0
  %v655 = vpop.f32.mrf.mxu0
  %v656 = vadd.f32 %v456, %v655
  %v657 = vpop.f32.mrf.mxu0
  %658 = vmatprep.mubr.bf16.mxu0 0
  %659 = vmatmul.mubr.bf16.gmra.mxu0 %v434
  %v660 = vpop.f32.mrf.mxu0
  %v661 = vadd.f32 %v456, %v660
  %v662 = vpop.f32.mrf.mxu0
  %v663 = vpop.f32.mrf.mxu0
  %v664 = vadd.f32 %v456, %v663
  %v665 = vpop.f32.mrf.mxu0
  %666 = vdwg.mxu0
  %v667 = vmax.f32 %v541, 0.0
  %v668 = vmax.f32 %v544, 0.0
  %v669 = vmax.f32 %v549, 0.0
  %v670 = vmax.f32 %v552, 0.0
  %v671 = vmax.f32 %v557, 0.0
  %v672 = vmax.f32 %v560, 0.0
  %v673 = vmax.f32 %v565, 0.0
  %v674 = vmax.f32 %v568, 0.0
  %v675 = vmax.f32 %v573, 0.0
  %v676 = vmax.f32 %v576, 0.0
  %v677 = vmax.f32 %v581, 0.0
  %v678 = vmax.f32 %v584, 0.0
  %v679 = vmax.f32 %v589, 0.0
  %v680 = vmax.f32 %v592, 0.0
  %v681 = vmax.f32 %v597, 0.0
  %v682 = vmax.f32 %v600, 0.0
  %v683 = vmax.f32 %v605, 0.0
  %v684 = vmax.f32 %v608, 0.0
  %v685 = vmax.f32 %v613, 0.0
  %v686 = vmax.f32 %v616, 0.0
  %v687 = vmax.f32 %v621, 0.0
  %v688 = vmax.f32 %v624, 0.0
  %v689 = vmax.f32 %v629, 0.0
  %v690 = vmax.f32 %v632, 0.0
  %v691 = vmax.f32 %v637, 0.0
  %v692 = vmax.f32 %v640, 0.0
  %v693 = vmax.f32 %v645, 0.0
  %v694 = vmax.f32 %v648, 0.0
  %v695 = vmax.f32 %v653, 0.0
  %v696 = vmax.f32 %v656, 0.0
  %v697 = vmax.f32 %v661, 0.0
  %v698 = vmax.f32 %v664, 0.0
  %v699 = vpack.c.bf16 %v668, %v667
  %v700 = vpack.c.bf16 %v670, %v669
  %v701 = vpack.c.bf16 %v672, %v671
  %v702 = vpack.c.bf16 %v674, %v673
  %v703 = vpack.c.bf16 %v676, %v675
  %v704 = vpack.c.bf16 %v678, %v677
  %v705 = vpack.c.bf16 %v680, %v679
  %v706 = vpack.c.bf16 %v682, %v681
  %v707 = vpack.c.bf16 %v684, %v683
  %v708 = vpack.c.bf16 %v686, %v685
  %v709 = vpack.c.bf16 %v688, %v687
  %v710 = vpack.c.bf16 %v690, %v689
  %v711 = vpack.c.bf16 %v692, %v691
  %v712 = vpack.c.bf16 %v694, %v693
  %v713 = vpack.c.bf16 %v696, %v695
  %v714 = vpack.c.bf16 %v698, %v697
  %s715 = scalar_lea.vmem %s3, 64
  %v716 = vld [vmem:[%s715] sm:$0xf]
  %v717 = vld [vmem:[%s715 + $0x4] sm:$0xf]
  %v718 = vld [vmem:[%s715 + $0x8] sm:$0xf]
  %v719 = vld [vmem:[%s715 + $0xc] sm:$0xf]
  %v720 = vld [vmem:[%s715 + $0x10] sm:$0xf]
  %v721 = vld [vmem:[%s715 + $0x14] sm:$0xf]
  %v722 = vld [vmem:[%s715 + $0x18] sm:$0xf]
  %v723 = vld [vmem:[%s715 + $0x1c] sm:$0xf]
  %v724 = vld [vmem:[%s715 + $0x20] sm:$0xf]
  %v725 = vld [vmem:[%s715 + $0x24] sm:$0xf]
  %v726 = vld [vmem:[%s715 + $0x28] sm:$0xf]
  %v727 = vld [vmem:[%s715 + $0x2c] sm:$0xf]
  %v728 = vld [vmem:[%s715 + $0x30] sm:$0xf]
  %v729 = vld [vmem:[%s715 + $0x34] sm:$0xf]
  %v730 = vld [vmem:[%s715 + $0x38] sm:$0xf]
  %v731 = vld [vmem:[%s715 + $0x3c] sm:$0xf]
  %s732 = scalar_lea.vmem %s4, 1
  %v733 = vld [vmem:[%s732] sm:$0x1]
  %v735 = vlaneseq
  %v736 = vshrl.u32 %v735, 7
  %v737 = vsub.s32 0, %v736
  %v738 = vrot.slane %v733, %v737
  %v756 = vunpack.c.l.b16 %v716
  %v757 = vunpack.c.l.b16 %v717
  %v758 = vunpack.c.l.b16 %v718
  %v759 = vunpack.c.l.b16 %v719
  %v760 = vunpack.c.l.b16 %v720
  %v761 = vunpack.c.l.b16 %v721
  %v762 = vunpack.c.l.b16 %v722
  %v763 = vunpack.c.l.b16 %v723
  %v764 = vunpack.c.l.b16 %v724
  %v765 = vunpack.c.l.b16 %v725
  %v766 = vunpack.c.l.b16 %v726
  %v767 = vunpack.c.l.b16 %v727
  %v768 = vunpack.c.l.b16 %v728
  %v769 = vunpack.c.l.b16 %v729
  %v770 = vunpack.c.l.b16 %v730
  %v771 = vunpack.c.l.b16 %v731
  %v772 = vpack.c.b16 %v757, %v756
  %v773 = vpack.c.b16 %v759, %v758
  %v774 = vpack.c.b16 %v761, %v760
  %v775 = vpack.c.b16 %v763, %v762
  %v776 = vpack.c.b16 %v765, %v764
  %v777 = vpack.c.b16 %v767, %v766
  %v778 = vpack.c.b16 %v769, %v768
  %v779 = vpack.c.b16 %v771, %v770
  %788 = vmatprep.subr.bf16.mxu0 0
  %789 = vmatpush1.bf16.msra.mxu0 %v779
  %790 = vmatprep.subr.bf16.mxu0 0
  %791 = vmatpush1.bf16.msra.mxu0 %v778
  %792 = vmatprep.subr.bf16.mxu0 0
  %793 = vmatpush1.bf16.msra.mxu0 %v777
  %794 = vmatprep.subr.bf16.mxu0 0
  %795 = vmatpush1.bf16.msra.mxu0 %v776
  %796 = vmatprep.subr.bf16.mxu0 0
  %797 = vmatpush1.bf16.msra.mxu0 %v775
  %798 = vmatprep.subr.bf16.mxu0 0
  %799 = vmatpush1.bf16.msra.mxu0 %v774
  %800 = vmatprep.subr.bf16.mxu0 0
  %801 = vmatpush1.bf16.msra.mxu0 %v773
  %802 = vmatprep.subr.bf16.mxu0 0
  %803 = vmatpush1.bf16.msra.mxu0 %v772
  %804 = vmatprep.subr.bf16.mxu0 0
  %805 = vmatpush2.bf16.msra.mxu0 0
  %806 = vmatprep.subr.bf16.mxu0 0
  %807 = vmatpush2.bf16.msra.mxu0 0
  %808 = vmatprep.subr.bf16.mxu0 0
  %809 = vmatpush2.bf16.msra.mxu0 0
  %810 = vmatprep.subr.bf16.mxu0 0
  %811 = vmatpush2.bf16.msra.mxu0 0
  %812 = vmatprep.subr.bf16.mxu0 0
  %813 = vmatpush2.bf16.msra.mxu0 0
  %814 = vmatprep.subr.bf16.mxu0 0
  %815 = vmatpush2.bf16.msra.mxu0 0
  %816 = vmatprep.subr.bf16.mxu0 0
  %817 = vmatpush2.bf16.msra.mxu0 0
  %818 = vmatprep.subr.bf16.mxu0 0
  %819 = vmatpush2.bf16.msra.mxu0 0
  %820 = vmatprep.mubr.bf16.mxu0 0
  %821 = vmatmul.mubr.bf16.gmra.mxu0 %v699
  %v822 = vpop.f32.mrf.mxu0
  %v823 = vadd.f32 %v738, %v822
  %v824 = vpop.f32.mrf.mxu0
  %v825 = vpop.f32.mrf.mxu0
  %v826 = vadd.f32 %v738, %v825
  %v827 = vpop.f32.mrf.mxu0
  %828 = vmatprep.mubr.bf16.mxu0 0
  %829 = vmatmul.mubr.bf16.gmra.mxu0 %v700
  %v830 = vpop.f32.mrf.mxu0
  %v831 = vadd.f32 %v738, %v830
  %v832 = vpop.f32.mrf.mxu0
  %v833 = vpop.f32.mrf.mxu0
  %v834 = vadd.f32 %v738, %v833
  %v835 = vpop.f32.mrf.mxu0
  %836 = vmatprep.mubr.bf16.mxu0 0
  %837 = vmatmul.mubr.bf16.gmra.mxu0 %v701
  %v838 = vpop.f32.mrf.mxu0
  %v839 = vadd.f32 %v738, %v838
  %v840 = vpop.f32.mrf.mxu0
  %v841 = vpop.f32.mrf.mxu0
  %v842 = vadd.f32 %v738, %v841
  %v843 = vpop.f32.mrf.mxu0
  %844 = vmatprep.mubr.bf16.mxu0 0
  %845 = vmatmul.mubr.bf16.gmra.mxu0 %v702
  %v846 = vpop.f32.mrf.mxu0
  %v847 = vadd.f32 %v738, %v846
  %v848 = vpop.f32.mrf.mxu0
  %v849 = vpop.f32.mrf.mxu0
  %v850 = vadd.f32 %v738, %v849
  %v851 = vpop.f32.mrf.mxu0
  %852 = vmatprep.mubr.bf16.mxu0 0
  %853 = vmatmul.mubr.bf16.gmra.mxu0 %v703
  %v854 = vpop.f32.mrf.mxu0
  %v855 = vadd.f32 %v738, %v854
  %v856 = vpop.f32.mrf.mxu0
  %v857 = vpop.f32.mrf.mxu0
  %v858 = vadd.f32 %v738, %v857
  %v859 = vpop.f32.mrf.mxu0
  %860 = vmatprep.mubr.bf16.mxu0 0
  %861 = vmatmul.mubr.bf16.gmra.mxu0 %v704
  %v862 = vpop.f32.mrf.mxu0
  %v863 = vadd.f32 %v738, %v862
  %v864 = vpop.f32.mrf.mxu0
  %v865 = vpop.f32.mrf.mxu0
  %v866 = vadd.f32 %v738, %v865
  %v867 = vpop.f32.mrf.mxu0
  %868 = vmatprep.mubr.bf16.mxu0 0
  %869 = vmatmul.mubr.bf16.gmra.mxu0 %v705
  %v870 = vpop.f32.mrf.mxu0
  %v871 = vadd.f32 %v738, %v870
  %v872 = vpop.f32.mrf.mxu0
  %v873 = vpop.f32.mrf.mxu0
  %v874 = vadd.f32 %v738, %v873
  %v875 = vpop.f32.mrf.mxu0
  %876 = vmatprep.mubr.bf16.mxu0 0
  %877 = vmatmul.mubr.bf16.gmra.mxu0 %v706
  %v878 = vpop.f32.mrf.mxu0
  %v879 = vadd.f32 %v738, %v878
  %v880 = vpop.f32.mrf.mxu0
  %v881 = vpop.f32.mrf.mxu0
  %v882 = vadd.f32 %v738, %v881
  %v883 = vpop.f32.mrf.mxu0
  %884 = vmatprep.mubr.bf16.mxu0 0
  %885 = vmatmul.mubr.bf16.gmra.mxu0 %v707
  %v886 = vpop.f32.mrf.mxu0
  %v887 = vadd.f32 %v738, %v886
  %v888 = vpop.f32.mrf.mxu0
  %v889 = vpop.f32.mrf.mxu0
  %v890 = vadd.f32 %v738, %v889
  %v891 = vpop.f32.mrf.mxu0
  %892 = vmatprep.mubr.bf16.mxu0 0
  %893 = vmatmul.mubr.bf16.gmra.mxu0 %v708
  %v894 = vpop.f32.mrf.mxu0
  %v895 = vadd.f32 %v738, %v894
  %v896 = vpop.f32.mrf.mxu0
  %v897 = vpop.f32.mrf.mxu0
  %v898 = vadd.f32 %v738, %v897
  %v899 = vpop.f32.mrf.mxu0
  %900 = vmatprep.mubr.bf16.mxu0 0
  %901 = vmatmul.mubr.bf16.gmra.mxu0 %v709
  %v902 = vpop.f32.mrf.mxu0
  %v903 = vadd.f32 %v738, %v902
  %v904 = vpop.f32.mrf.mxu0
  %v905 = vpop.f32.mrf.mxu0
  %v906 = vadd.f32 %v738, %v905
  %v907 = vpop.f32.mrf.mxu0
  %908 = vmatprep.mubr.bf16.mxu0 0
  %909 = vmatmul.mubr.bf16.gmra.mxu0 %v710
  %v910 = vpop.f32.mrf.mxu0
  %v911 = vadd.f32 %v738, %v910
  %v912 = vpop.f32.mrf.mxu0
  %v913 = vpop.f32.mrf.mxu0
  %v914 = vadd.f32 %v738, %v913
  %v915 = vpop.f32.mrf.mxu0
  %916 = vmatprep.mubr.bf16.mxu0 0
  %917 = vmatmul.mubr.bf16.gmra.mxu0 %v711
  %v918 = vpop.f32.mrf.mxu0
  %v919 = vadd.f32 %v738, %v918
  %v920 = vpop.f32.mrf.mxu0
  %v921 = vpop.f32.mrf.mxu0
  %v922 = vadd.f32 %v738, %v921
  %v923 = vpop.f32.mrf.mxu0
  %924 = vmatprep.mubr.bf16.mxu0 0
  %925 = vmatmul.mubr.bf16.gmra.mxu0 %v712
  %v926 = vpop.f32.mrf.mxu0
  %v927 = vadd.f32 %v738, %v926
  %v928 = vpop.f32.mrf.mxu0
  %v929 = vpop.f32.mrf.mxu0
  %v930 = vadd.f32 %v738, %v929
  %v931 = vpop.f32.mrf.mxu0
  %932 = vmatprep.mubr.bf16.mxu0 0
  %933 = vmatmul.mubr.bf16.gmra.mxu0 %v713
  %v934 = vpop.f32.mrf.mxu0
  %v935 = vadd.f32 %v738, %v934
  %v936 = vpop.f32.mrf.mxu0
  %v937 = vpop.f32.mrf.mxu0
  %v938 = vadd.f32 %v738, %v937
  %v939 = vpop.f32.mrf.mxu0
  %940 = vmatprep.mubr.bf16.mxu0 0
  %941 = vmatmul.mubr.bf16.gmra.mxu0 %v714
  %v942 = vpop.f32.mrf.mxu0
  %v943 = vadd.f32 %v738, %v942
  %v944 = vpop.f32.mrf.mxu0
  %v945 = vpop.f32.mrf.mxu0
  %v946 = vadd.f32 %v738, %v945
  %v947 = vpop.f32.mrf.mxu0
  %948 = vdwg.mxu0
  %v949 = vmax.f32 %v823, 0.0
  %v950 = vmax.f32 %v826, 0.0
  %v951 = vmax.f32 %v831, 0.0
  %v952 = vmax.f32 %v834, 0.0
  %v953 = vmax.f32 %v839, 0.0
  %v954 = vmax.f32 %v842, 0.0
  %v955 = vmax.f32 %v847, 0.0
  %v956 = vmax.f32 %v850, 0.0
  %v957 = vmax.f32 %v855, 0.0
  %v958 = vmax.f32 %v858, 0.0
  %v959 = vmax.f32 %v863, 0.0
  %v960 = vmax.f32 %v866, 0.0
  %v961 = vmax.f32 %v871, 0.0
  %v962 = vmax.f32 %v874, 0.0
  %v963 = vmax.f32 %v879, 0.0
  %v964 = vmax.f32 %v882, 0.0
  %v965 = vmax.f32 %v887, 0.0
  %v966 = vmax.f32 %v890, 0.0
  %v967 = vmax.f32 %v895, 0.0
  %v968 = vmax.f32 %v898, 0.0
  %v969 = vmax.f32 %v903, 0.0
  %v970 = vmax.f32 %v906, 0.0
  %v971 = vmax.f32 %v911, 0.0
  %v972 = vmax.f32 %v914, 0.0
  %v973 = vmax.f32 %v919, 0.0
  %v974 = vmax.f32 %v922, 0.0
  %v975 = vmax.f32 %v927, 0.0
  %v976 = vmax.f32 %v930, 0.0
  %v977 = vmax.f32 %v935, 0.0
  %v978 = vmax.f32 %v938, 0.0
  %v979 = vmax.f32 %v943, 0.0
  %v980 = vmax.f32 %v946, 0.0
  %v981 = vpack.c.bf16 %v950, %v949
  %v982 = vpack.c.bf16 %v952, %v951
  %v983 = vpack.c.bf16 %v954, %v953
  %v984 = vpack.c.bf16 %v956, %v955
  %v985 = vpack.c.bf16 %v958, %v957
  %v986 = vpack.c.bf16 %v960, %v959
  %v987 = vpack.c.bf16 %v962, %v961
  %v988 = vpack.c.bf16 %v964, %v963
  %v989 = vpack.c.bf16 %v966, %v965
  %v990 = vpack.c.bf16 %v968, %v967
  %v991 = vpack.c.bf16 %v970, %v969
  %v992 = vpack.c.bf16 %v972, %v971
  %v993 = vpack.c.bf16 %v974, %v973
  %v994 = vpack.c.bf16 %v976, %v975
  %v995 = vpack.c.bf16 %v978, %v977
  %v996 = vpack.c.bf16 %v980, %v979
  %v997 = vld [vmem:[%s5] sm:$0xf]
  %v998 = vld [vmem:[%s5 + $0x4] sm:$0xf]
  %v999 = vld [vmem:[%s5 + $0x8] sm:$0xf]
  %v1000 = vld [vmem:[%s5 + $0xc] sm:$0xf]
  %v1001 = vld [vmem:[%s5 + $0x10] sm:$0xf]
  %v1002 = vld [vmem:[%s5 + $0x14] sm:$0xf]
  %v1003 = vld [vmem:[%s5 + $0x18] sm:$0xf]
  %v1004 = vld [vmem:[%s5 + $0x1c] sm:$0xf]
  %v1005 = vld [vmem:[%s5 + $0x20] sm:$0xf]
  %v1006 = vld [vmem:[%s5 + $0x24] sm:$0xf]
  %v1007 = vld [vmem:[%s5 + $0x28] sm:$0xf]
  %v1008 = vld [vmem:[%s5 + $0x2c] sm:$0xf]
  %v1009 = vld [vmem:[%s5 + $0x30] sm:$0xf]
  %v1010 = vld [vmem:[%s5 + $0x34] sm:$0xf]
  %v1011 = vld [vmem:[%s5 + $0x38] sm:$0xf]
  %v1012 = vld [vmem:[%s5 + $0x3c] sm:$0xf]
  %v1013 = vld [vmem:[%s6] sm:$0x1]
  %v1015 = vlaneseq
  %v1016 = vshrl.u32 %v1015, 7
  %v1017 = vsub.s32 0, %v1016
  %v1018 = vrot.slane %v1013, %v1017
  %v1036 = vunpack.c.l.b16 %v997
  %v1037 = vunpack.c.l.b16 %v998
  %v1038 = vunpack.c.l.b16 %v999
  %v1039 = vunpack.c.l.b16 %v1000
  %v1040 = vunpack.c.l.b16 %v1001
  %v1041 = vunpack.c.l.b16 %v1002
  %v1042 = vunpack.c.l.b16 %v1003
  %v1043 = vunpack.c.l.b16 %v1004
  %v1044 = vunpack.c.l.b16 %v1005
  %v1045 = vunpack.c.l.b16 %v1006
  %v1046 = vunpack.c.l.b16 %v1007
  %v1047 = vunpack.c.l.b16 %v1008
  %v1048 = vunpack.c.l.b16 %v1009
  %v1049 = vunpack.c.l.b16 %v1010
  %v1050 = vunpack.c.l.b16 %v1011
  %v1051 = vunpack.c.l.b16 %v1012
  %v1052 = vpack.c.b16 %v1037, %v1036
  %v1053 = vpack.c.b16 %v1039, %v1038
  %v1054 = vpack.c.b16 %v1041, %v1040
  %v1055 = vpack.c.b16 %v1043, %v1042
  %v1056 = vpack.c.b16 %v1045, %v1044
  %v1057 = vpack.c.b16 %v1047, %v1046
  %v1058 = vpack.c.b16 %v1049, %v1048
  %v1059 = vpack.c.b16 %v1051, %v1050
  %1068 = vmatprep.subr.bf16.mxu0 0
  %1069 = vmatpush1.bf16.msra.mxu0 %v1059
  %1070 = vmatprep.subr.bf16.mxu0 0
  %1071 = vmatpush1.bf16.msra.mxu0 %v1058
  %1072 = vmatprep.subr.bf16.mxu0 0
  %1073 = vmatpush1.bf16.msra.mxu0 %v1057
  %1074 = vmatprep.subr.bf16.mxu0 0
  %1075 = vmatpush1.bf16.msra.mxu0 %v1056
  %1076 = vmatprep.subr.bf16.mxu0 0
  %1077 = vmatpush1.bf16.msra.mxu0 %v1055
  %1078 = vmatprep.subr.bf16.mxu0 0
  %1079 = vmatpush1.bf16.msra.mxu0 %v1054
  %1080 = vmatprep.subr.bf16.mxu0 0
  %1081 = vmatpush1.bf16.msra.mxu0 %v1053
  %1082 = vmatprep.subr.bf16.mxu0 0
  %1083 = vmatpush1.bf16.msra.mxu0 %v1052
  %1084 = vmatprep.subr.bf16.mxu0 0
  %1085 = vmatpush2.bf16.msra.mxu0 0
  %1086 = vmatprep.subr.bf16.mxu0 0
  %1087 = vmatpush2.bf16.msra.mxu0 0
  %1088 = vmatprep.subr.bf16.mxu0 0
  %1089 = vmatpush2.bf16.msra.mxu0 0
  %1090 = vmatprep.subr.bf16.mxu0 0
  %1091 = vmatpush2.bf16.msra.mxu0 0
  %1092 = vmatprep.subr.bf16.mxu0 0
  %1093 = vmatpush2.bf16.msra.mxu0 0
  %1094 = vmatprep.subr.bf16.mxu0 0
  %1095 = vmatpush2.bf16.msra.mxu0 0
  %1096 = vmatprep.subr.bf16.mxu0 0
  %1097 = vmatpush2.bf16.msra.mxu0 0
  %1098 = vmatprep.subr.bf16.mxu0 0
  %1099 = vmatpush2.bf16.msra.mxu0 0
  %1100 = vmatprep.mubr.bf16.mxu0 0
  %1101 = vmatmul.mubr.bf16.gmra.mxu0 %v981
  %v1102 = vpop.f32.mrf.mxu0
  %v1103 = vadd.f32 %v1018, %v1102
  %v1104 = vpop.f32.mrf.mxu0
  %v1105 = vpop.f32.mrf.mxu0
  %v1106 = vadd.f32 %v1018, %v1105
  %v1107 = vpop.f32.mrf.mxu0
  %1108 = vmatprep.mubr.bf16.mxu0 0
  %1109 = vmatmul.mubr.bf16.gmra.mxu0 %v982
  %v1110 = vpop.f32.mrf.mxu0
  %v1111 = vadd.f32 %v1018, %v1110
  %v1112 = vpop.f32.mrf.mxu0
  %v1113 = vpop.f32.mrf.mxu0
  %v1114 = vadd.f32 %v1018, %v1113
  %v1115 = vpop.f32.mrf.mxu0
  %1116 = vmatprep.mubr.bf16.mxu0 0
  %1117 = vmatmul.mubr.bf16.gmra.mxu0 %v983
  %v1118 = vpop.f32.mrf.mxu0
  %v1119 = vadd.f32 %v1018, %v1118
  %v1120 = vpop.f32.mrf.mxu0
  %v1121 = vpop.f32.mrf.mxu0
  %v1122 = vadd.f32 %v1018, %v1121
  %v1123 = vpop.f32.mrf.mxu0
  %1124 = vmatprep.mubr.bf16.mxu0 0
  %1125 = vmatmul.mubr.bf16.gmra.mxu0 %v984
  %v1126 = vpop.f32.mrf.mxu0
  %v1127 = vadd.f32 %v1018, %v1126
  %v1128 = vpop.f32.mrf.mxu0
  %v1129 = vpop.f32.mrf.mxu0
  %v1130 = vadd.f32 %v1018, %v1129
  %v1131 = vpop.f32.mrf.mxu0
  %1132 = vmatprep.mubr.bf16.mxu0 0
  %1133 = vmatmul.mubr.bf16.gmra.mxu0 %v985
  %v1134 = vpop.f32.mrf.mxu0
  %v1135 = vadd.f32 %v1018, %v1134
  %v1136 = vpop.f32.mrf.mxu0
  %v1137 = vpop.f32.mrf.mxu0
  %v1138 = vadd.f32 %v1018, %v1137
  %v1139 = vpop.f32.mrf.mxu0
  %1140 = vmatprep.mubr.bf16.mxu0 0
  %1141 = vmatmul.mubr.bf16.gmra.mxu0 %v986
  %v1142 = vpop.f32.mrf.mxu0
  %v1143 = vadd.f32 %v1018, %v1142
  %v1144 = vpop.f32.mrf.mxu0
  %v1145 = vpop.f32.mrf.mxu0
  %v1146 = vadd.f32 %v1018, %v1145
  %v1147 = vpop.f32.mrf.mxu0
  %1148 = vmatprep.mubr.bf16.mxu0 0
  %1149 = vmatmul.mubr.bf16.gmra.mxu0 %v987
  %v1150 = vpop.f32.mrf.mxu0
  %v1151 = vadd.f32 %v1018, %v1150
  %v1152 = vpop.f32.mrf.mxu0
  %v1153 = vpop.f32.mrf.mxu0
  %v1154 = vadd.f32 %v1018, %v1153
  %v1155 = vpop.f32.mrf.mxu0
  %1156 = vmatprep.mubr.bf16.mxu0 0
  %1157 = vmatmul.mubr.bf16.gmra.mxu0 %v988
  %v1158 = vpop.f32.mrf.mxu0
  %v1159 = vadd.f32 %v1018, %v1158
  %v1160 = vpop.f32.mrf.mxu0
  %v1161 = vpop.f32.mrf.mxu0
  %v1162 = vadd.f32 %v1018, %v1161
  %v1163 = vpop.f32.mrf.mxu0
  %1164 = vmatprep.mubr.bf16.mxu0 0
  %1165 = vmatmul.mubr.bf16.gmra.mxu0 %v989
  %v1166 = vpop.f32.mrf.mxu0
  %v1167 = vadd.f32 %v1018, %v1166
  %v1168 = vpop.f32.mrf.mxu0
  %v1169 = vpop.f32.mrf.mxu0
  %v1170 = vadd.f32 %v1018, %v1169
  %v1171 = vpop.f32.mrf.mxu0
  %1172 = vmatprep.mubr.bf16.mxu0 0
  %1173 = vmatmul.mubr.bf16.gmra.mxu0 %v990
  %v1174 = vpop.f32.mrf.mxu0
  %v1175 = vadd.f32 %v1018, %v1174
  %v1176 = vpop.f32.mrf.mxu0
  %v1177 = vpop.f32.mrf.mxu0
  %v1178 = vadd.f32 %v1018, %v1177
  %v1179 = vpop.f32.mrf.mxu0
  %1180 = vmatprep.mubr.bf16.mxu0 0
  %1181 = vmatmul.mubr.bf16.gmra.mxu0 %v991
  %v1182 = vpop.f32.mrf.mxu0
  %v1183 = vadd.f32 %v1018, %v1182
  %v1184 = vpop.f32.mrf.mxu0
  %v1185 = vpop.f32.mrf.mxu0
  %v1186 = vadd.f32 %v1018, %v1185
  %v1187 = vpop.f32.mrf.mxu0
  %1188 = vmatprep.mubr.bf16.mxu0 0
  %1189 = vmatmul.mubr.bf16.gmra.mxu0 %v992
  %v1190 = vpop.f32.mrf.mxu0
  %v1191 = vadd.f32 %v1018, %v1190
  %v1192 = vpop.f32.mrf.mxu0
  %v1193 = vpop.f32.mrf.mxu0
  %v1194 = vadd.f32 %v1018, %v1193
  %v1195 = vpop.f32.mrf.mxu0
  %1196 = vmatprep.mubr.bf16.mxu0 0
  %1197 = vmatmul.mubr.bf16.gmra.mxu0 %v993
  %v1198 = vpop.f32.mrf.mxu0
  %v1199 = vadd.f32 %v1018, %v1198
  %v1200 = vpop.f32.mrf.mxu0
  %v1201 = vpop.f32.mrf.mxu0
  %v1202 = vadd.f32 %v1018, %v1201
  %v1203 = vpop.f32.mrf.mxu0
  %1204 = vmatprep.mubr.bf16.mxu0 0
  %1205 = vmatmul.mubr.bf16.gmra.mxu0 %v994
  %v1206 = vpop.f32.mrf.mxu0
  %v1207 = vadd.f32 %v1018, %v1206
  %v1208 = vpop.f32.mrf.mxu0
  %v1209 = vpop.f32.mrf.mxu0
  %v1210 = vadd.f32 %v1018, %v1209
  %v1211 = vpop.f32.mrf.mxu0
  %1212 = vmatprep.mubr.bf16.mxu0 0
  %1213 = vmatmul.mubr.bf16.gmra.mxu0 %v995
  %v1214 = vpop.f32.mrf.mxu0
  %v1215 = vadd.f32 %v1018, %v1214
  %v1216 = vpop.f32.mrf.mxu0
  %v1217 = vpop.f32.mrf.mxu0
  %v1218 = vadd.f32 %v1018, %v1217
  %v1219 = vpop.f32.mrf.mxu0
  %1220 = vmatprep.mubr.bf16.mxu0 0
  %1221 = vmatmul.mubr.bf16.gmra.mxu0 %v996
  %v1222 = vpop.f32.mrf.mxu0
  %v1223 = vadd.f32 %v1018, %v1222
  %v1224 = vpop.f32.mrf.mxu0
  %v1225 = vpop.f32.mrf.mxu0
  %v1226 = vadd.f32 %v1018, %v1225
  %v1227 = vpop.f32.mrf.mxu0
  %1228 = vdwg.mxu0
  %1229 = vst [vmem:[%s7] sm:$0xff] %v1103
  %1230 = vst [vmem:[%s7 + $0x8] sm:$0xff] %v1106
  %1231 = vst [vmem:[%s7 + $0x10] sm:$0xff] %v1111
  %1232 = vst [vmem:[%s7 + $0x18] sm:$0xff] %v1114
  %1233 = vst [vmem:[%s7 + $0x20] sm:$0xff] %v1119
  %1234 = vst [vmem:[%s7 + $0x28] sm:$0xff] %v1122
  %1235 = vst [vmem:[%s7 + $0x30] sm:$0xff] %v1127
  %1236 = vst [vmem:[%s7 + $0x38] sm:$0xff] %v1130
  %1237 = vst [vmem:[%s7 + $0x40] sm:$0xff] %v1135
  %1238 = vst [vmem:[%s7 + $0x48] sm:$0xff] %v1138
  %1239 = vst [vmem:[%s7 + $0x50] sm:$0xff] %v1143
  %1240 = vst [vmem:[%s7 + $0x58] sm:$0xff] %v1146
  %1241 = vst [vmem:[%s7 + $0x60] sm:$0xff] %v1151
  %1242 = vst [vmem:[%s7 + $0x68] sm:$0xff] %v1154
  %1243 = vst [vmem:[%s7 + $0x70] sm:$0xff] %v1159
  %1244 = vst [vmem:[%s7 + $0x78] sm:$0xff] %v1162
  %1245 = vst [vmem:[%s7 + $0x80] sm:$0xff] %v1167
  %1246 = vst [vmem:[%s7 + $0x88] sm:$0xff] %v1170
  %1247 = vst [vmem:[%s7 + $0x90] sm:$0xff] %v1175
  %1248 = vst [vmem:[%s7 + $0x98] sm:$0xff] %v1178
  %1249 = vst [vmem:[%s7 + $0xa0] sm:$0xff] %v1183
  %1250 = vst [vmem:[%s7 + $0xa8] sm:$0xff] %v1186
  %1251 = vst [vmem:[%s7 + $0xb0] sm:$0xff] %v1191
  %1252 = vst [vmem:[%s7 + $0xb8] sm:$0xff] %v1194
  %1253 = vst [vmem:[%s7 + $0xc0] sm:$0xff] %v1199
  %1254 = vst [vmem:[%s7 + $0xc8] sm:$0xff] %v1202
  %1255 = vst [vmem:[%s7 + $0xd0] sm:$0xff] %v1207
  %1256 = vst [vmem:[%s7 + $0xd8] sm:$0xff] %v1210
  %1257 = vst [vmem:[%s7 + $0xe0] sm:$0xff] %v1215
  %1258 = vst [vmem:[%s7 + $0xe8] sm:$0xff] %v1218
  %1259 = vst [vmem:[%s7 + $0xf0] sm:$0xff] %v1223
  %1260 = vst [vmem:[%s7 + $0xf8] sm:$0xff] %v1226
  // Predicated region
  $region30: #{mlp_forward.1} parent=0 // pred_check
    _
  $region31: #{mlp_forward.1} parent=0 // pred_check_branch
    %1262 = sbr.rel (0) target = $region33
  $region32: #{mlp_forward.1} parent=0 // pred_region
    _
  $region33: #{mlp_forward.1} parent=0 // pred_fallthru
    _
  // Predicated region
  $region34: #{mlp_forward.1} parent=0 // pred_check
    _
  $region35: #{mlp_forward.1} parent=0 // pred_check_branch
    %1264 = sbr.rel (0) target = $region37
  $region36: #{mlp_forward.1} parent=0 // pred_region
    _
  $region37: #{mlp_forward.1} parent=0 // pred_fallthru
    _

</llo_original>
